<compile_context>
chip_gen: v6e
topology: v6e:2x2x1
jax: 0.10.0
libtpu: 0.0.40
codegen_flags: <defaults>
</compile_context>

<pallas_src>
import functools

import jax
import jax.numpy as jnp
from jax.experimental import pallas as pl
from jax.experimental.pallas import tpu as pltpu


# ---------------------------------------------------------------------------
# Kernel
# ---------------------------------------------------------------------------
def _proto_kernel(q_ref, s_ref, o_ref, *, way, shot, mode):
    # q_ref: (T, WQ, C)  block of T episodes, WQ = way * query_num
    # s_ref: (T, WS, C)  WS = way * shot
    # o_ref: (T, way, WQ)   (transposed vs. the public layout; lane dim = WQ)
    q = q_ref[...]                      # native dtype: bf16 stays bf16 on the MXU
    s = s_ref[...]
    tb = q.shape[0]
    ws = way * shot
    mm_dtype = q.dtype

    # Exact 0/1 class-membership pooling matrix; the 1/shot average is applied
    # in f32 AFTER the matmul so bf16(1/shot) never biases the prototypes.
    row = jax.lax.broadcasted_iota(jnp.int32, (way, ws), 0)
    col = jax.lax.broadcasted_iota(jnp.int32, (way, ws), 1)
    in_class = (col >= row * shot) & (col < (row + 1) * shot)
    pool = jnp.where(in_class, 1.0, 0.0).astype(mm_dtype)            # (way, WS)
    # Tiny broadcast (tb*way*ws elements) keeps Mosaic on the supported batched
    # dot_general path (rank-mixed non-batched dot_general is not reliable).
    pool_b = jnp.broadcast_to(pool[None], (tb, way, ws))

    proto_f32 = jnp.einsum('tws,tsc->twc', pool_b, s,
                           preferred_element_type=jnp.float32) * (1.0 / shot)
    proto = proto_f32.astype(mm_dtype)                               # (T, way, C)

    # Lane-dense orientation: small dim (way) on the streamed-row side, WQ on
    # the MXU output lanes.  f32 accumulation.
    dots = jnp.einsum('twc,tqc->twq', proto, q,
                      preferred_element_type=jnp.float32)            # (T, way, WQ)

    if mode == 'euclidean':
        # -||q - p||^2 = 2 q.p - ||q||^2 - ||p||^2 with one consistent proto
        # precision (the same cast `proto` that fed the matmul); clamp at 0
        # (true value <= 0) to kill expansion/cancellation noise.
        q_sq = jnp.sum(q * q, axis=-1, dtype=jnp.float32)            # (T, WQ)
        p_sq = jnp.sum(proto * proto, axis=-1, dtype=jnp.float32)    # (T, way)
        out = 2.0 * dots - q_sq[:, None, :] - p_sq[:, :, None]
        out = jnp.minimum(out, 0.0)
    elif mode == 'cos_sim':
        # cos = (q . p) / (max(||q||,eps) * max(||p||,eps))  ==  normalize-then-dot.
        # Scaling the small (T,way,WQ) result avoids a normalized/f32 copy of the
        # big q tile; rsqrt runs on the EUP slot.
        eps_sq = 1e-24                                               # eps = 1e-12
        q_sq = jnp.sum(q * q, axis=-1, dtype=jnp.float32)
        p_sq = jnp.sum(proto * proto, axis=-1, dtype=jnp.float32)
        q_inv = jax.lax.rsqrt(jnp.maximum(q_sq, eps_sq))             # (T, WQ)
        p_inv = jax.lax.rsqrt(jnp.maximum(p_sq, eps_sq))             # (T, way)
        out = dots * p_inv[:, :, None] * q_inv[:, None, :]
    elif mode == 'dot':
        out = dots
    else:
        raise ValueError(f"unknown mode: {mode}")

    o_ref[...] = out.astype(o_ref.dtype)


# ---------------------------------------------------------------------------
# Block sizing helpers
# ---------------------------------------------------------------------------
def _round_up(x, m):
    return ((x + m - 1) // m) * m


def _sublane(itemsize):
    # 8 rows per vreg tile for 32-bit, 16 for bf16, 32 for int8.
    return max(8, 32 // max(itemsize, 1))


def _largest_divisor_at_most(n, cap):
    cap = max(1, min(int(cap), n))
    for d in range(cap, 0, -1):
        if n % d == 0:
            return d
    return 1


def _tpu_vmem_capacity_bytes():
    try:
        return int(pltpu.get_tpu_info().vmem_capacity_bytes)
    except Exception:
        return 128 * 1024 * 1024   # v5e/v6e-class default if the query fails


# ---------------------------------------------------------------------------
# Public wrapper
# ---------------------------------------------------------------------------
def proto_layer(query_feat, support_feat, way_num, shot_num, query_num,
                mode='euclidean', t_block=None, out_dtype=None,
                vmem_limit_bytes=None):
    """Pallas equivalent of ProtoLayer.forward. Returns (t, way*query, way)."""
    if mode not in ('euclidean', 'cos_sim', 'dot'):
        raise ValueError(f"unknown mode: {mode}")

    t, wq, c = query_feat.shape
    ts, ws, cs = support_feat.shape
    assert wq == way_num * query_num, "query count mismatch"
    assert ws == way_num * shot_num, "support count mismatch"
    assert ts == t and cs == c, "query/support shape mismatch"

    if support_feat.dtype != query_feat.dtype:
        support_feat = support_feat.astype(query_feat.dtype)
    if out_dtype is None:
        out_dtype = query_feat.dtype

    in_itemsize = jnp.dtype(query_feat.dtype).itemsize
    out_itemsize = jnp.dtype(out_dtype).itemsize
    sub_in = _sublane(in_itemsize)
    sub_out = _sublane(out_itemsize)
    c_pad = _round_up(c, 128)

    # Padded VMEM footprint per episode, including 2x double-buffering per spec.
    per_ep_vmem = (2 * _round_up(wq, sub_in) * c_pad * in_itemsize
                   + 2 * _round_up(ws, sub_in) * c_pad * in_itemsize
                   + 2 * _round_up(way_num, sub_out) * _round_up(wq, 128) * out_itemsize)
    # Raw HBM traffic per episode (actual DMA bytes).
    per_ep_hbm = (wq + ws) * c * in_itemsize + wq * way_num * out_itemsize

    vmem_cap = _tpu_vmem_capacity_bytes()
    if vmem_cap <= 64 * 1024 * 1024:        # v7x-class: 64 MiB per TensorCore
        gen_vmem_limit = 32 * 1024 * 1024
        target_hbm_block = 2 * 1024 * 1024
    else:                                   # v5e / v6e: 128 MiB
        gen_vmem_limit = 64 * 1024 * 1024
        target_hbm_block = 12 * 1024 * 1024

    if t_block is None:
        cap_vmem = max(1, (gen_vmem_limit // 2) // max(per_ep_vmem, 1))
        cap_hbm = max(1, target_hbm_block // max(per_ep_hbm, 1))
        cap_steps = max(1, t // 4)          # >= 4 grid steps when t allows
        t_block = min(cap_vmem, cap_hbm, cap_steps)
    # Never pad: snap to the largest divisor of t under the cap.
    t_block = _largest_divisor_at_most(t, t_block)
    n_blocks = t // t_block

    if vmem_limit_bytes is None:
        footprint = per_ep_vmem * t_block
        vmem_limit_bytes = int(min(vmem_cap,
                                   max(gen_vmem_limit, footprint + (8 << 20))))

    kernel = functools.partial(_proto_kernel, way=way_num, shot=shot_num,
                               mode=mode)

    # Kernel-internal output layout is (t, way, wq) so the lane dim is wq.
    out_twq = pl.pallas_call(
        kernel,
        out_shape=jax.ShapeDtypeStruct((t, way_num, wq), out_dtype),
        grid_spec=pltpu.PrefetchScalarGridSpec(
            num_scalar_prefetch=0,
            grid=(n_blocks,),
            in_specs=[
                pl.BlockSpec((t_block, wq, c), lambda i: (i, 0, 0)),
                pl.BlockSpec((t_block, ws, c), lambda i: (i, 0, 0)),
            ],
            out_specs=pl.BlockSpec((t_block, way_num, wq),
                                   lambda i: (i, 0, 0)),
        ),
        compiler_params=pltpu.CompilerParams(
            dimension_semantics=("parallel",),
            vmem_limit_bytes=vmem_limit_bytes),
    )(query_feat, support_feat)

    # Tiny transpose back to the module's public (t, wq, way) layout.
    return jnp.swapaxes(out_twq, 1, 2)


# ---------------------------------------------------------------------------
# Pure-JAX reference (mirrors the PyTorch module)
# ---------------------------------------------------------------------------
def _reference(query_feat, support_feat, way_num, shot_num, query_num, mode):
    t, _, c = query_feat.shape
    q = query_feat.reshape(t, way_num * query_num, c)
    s = support_feat.reshape(t, way_num, shot_num, c)
    proto = jnp.mean(s, axis=2)
    if mode == 'euclidean':
        return -jnp.sum((q[:, :, None, :] - proto[:, None, :, :]) ** 2, axis=3)
    if mode == 'cos_sim':
        qn = q / jnp.maximum(jnp.linalg.norm(q, axis=-1, keepdims=True), 1e-12)
        pn = proto / jnp.maximum(
            jnp.linalg.norm(proto, axis=-1, keepdims=True), 1e-12)
        return jnp.einsum('tqc,twc->tqw', qn, pn)
    if mode == 'dot':
        return jnp.einsum('tqc,twc->tqw', q, proto)
    raise ValueError(mode)


if __name__ == "__main__":
    key = jax.random.PRNGKey(0)

    # (t, way, shot, query, c): ProtoNet-style episode shapes.
    cases = [
        (2, 4, 2, 3, 32),      # tiny demo shapes, t_block = 1
        (5, 5, 5, 15, 64),     # t=5 (used to trigger padding before; now exact)
        (8, 5, 5, 15, 128),    # exercises t_block > 1 (batched in-kernel math)
    ]
    for (t, way_num, shot_num, query_num, c) in cases:
        key, k_q, k_s = jax.random.split(key, 3)
        query_feat = jax.random.normal(
            k_q, (t, way_num * query_num, c), dtype=jnp.float32)
        support_feat = jax.random.normal(
            k_s, (t, way_num * shot_num, c), dtype=jnp.float32)
        for mode in ('euclidean', 'cos_sim', 'dot'):
            out = proto_layer(query_feat, support_feat, way_num, shot_num,
                              query_num, mode=mode)
            out = jax.block_until_ready(out)
            ref = _reference(query_feat, support_feat, way_num, shot_num,
                             query_num, mode)
            assert out.shape == (t, way_num * query_num, way_num), out.shape
            assert jnp.allclose(out, ref, atol=1e-3, rtol=1e-3), (
                f"mismatch in mode {mode} for case "
                f"{(t, way_num, shot_num, query_num, c)}")

    # bf16-native path: MXU matmuls in bf16, accumulation/norm math in f32.
    t, way_num, shot_num, query_num, c = 3, 5, 2, 4, 64
    key, k_q, k_s = jax.random.split(key, 3)
    q_bf = jax.random.normal(
        k_q, (t, way_num * query_num, c), dtype=jnp.float32).astype(jnp.bfloat16)
    s_bf = jax.random.normal(
        k_s, (t, way_num * shot_num, c), dtype=jnp.float32).astype(jnp.bfloat16)
    for mode in ('euclidean', 'cos_sim', 'dot'):
        out = jax.block_until_ready(
            proto_layer(q_bf, s_bf, way_num, shot_num, query_num, mode=mode))
        ref = _reference(q_bf.astype(jnp.float32), s_bf.astype(jnp.float32),
                         way_num, shot_num, query_num, mode)
        assert out.shape == ref.shape, out.shape
        assert jnp.allclose(out.astype(jnp.float32), ref,
                            atol=5e-2, rtol=5e-2), f"bf16 {mode} mismatch"

    print("KERNEL_OK")
</pallas_src>

<mosaic_0001>
module attributes {stable_mosaic.version = 11 : i64} {
  func.func @_proto_kernel(%arg0: i32, %arg1: memref<1x12x32xf32, #tpu.memory_space<vmem>>, %arg2: memref<1x8x32xf32, #tpu.memory_space<vmem>>, %arg3: memref<1x4x12xf32, #tpu.memory_space<vmem>>) attributes {dimension_semantics = [#tpu.dimension_semantics<parallel>], iteration_bounds = array<i64: 2>, scalar_prefetch = 0 : i64, scratch_operands = 0 : i64, tpu.core_type = #tpu.core_type<tc>, window_params = [{transform_indices = @transform_0, window_bounds = array<i64: 1, 12, 32>}, {transform_indices = @transform_1, window_bounds = array<i64: 1, 8, 32>}, {transform_indices = @transform_2, window_bounds = array<i64: 1, 4, 12>}]} {
    %c0 = arith.constant 0 : index
    %c0_0 = arith.constant 0 : index
    %c0_1 = arith.constant 0 : index
    %0 = vector.load %arg1[%c0, %c0_0, %c0_1] : memref<1x12x32xf32, #tpu.memory_space<vmem>>, vector<1x12x32xf32>
    %c0_2 = arith.constant 0 : index
    %c0_3 = arith.constant 0 : index
    %c0_4 = arith.constant 0 : index
    %1 = vector.load %arg2[%c0_2, %c0_3, %c0_4] : memref<1x8x32xf32, #tpu.memory_space<vmem>>, vector<1x8x32xf32>
    %2 = tpu.iota {dimensions = array<i32: 0>} : vector<4x8xi32>
    %3 = tpu.iota {dimensions = array<i32: 1>} : vector<4x8xi32>
    %c2_i32 = arith.constant 2 : i32
    %4 = vector.broadcast %c2_i32 : i32 to vector<4x8xi32>
    %5 = arith.muli %2, %4 : vector<4x8xi32>
    %6 = arith.cmpi sge, %3, %5 : vector<4x8xi32>
    %c1_i32 = arith.constant 1 : i32
    %7 = vector.broadcast %c1_i32 : i32 to vector<4x8xi32>
    %8 = arith.addi %2, %7 : vector<4x8xi32>
    %c2_i32_5 = arith.constant 2 : i32
    %9 = vector.broadcast %c2_i32_5 : i32 to vector<4x8xi32>
    %10 = arith.muli %8, %9 : vector<4x8xi32>
    %11 = arith.cmpi slt, %3, %10 : vector<4x8xi32>
    %12 = arith.andi %6, %11 : vector<4x8xi1>
    %cst = arith.constant 1.000000e+00 : f32
    %cst_6 = arith.constant 0.000000e+00 : f32
    %13 = vector.broadcast %cst : f32 to vector<4x8xf32>
    %14 = vector.broadcast %cst_6 : f32 to vector<4x8xf32>
    %15 = arith.select %12, %13, %14 : vector<4x8xi1>, vector<4x8xf32>
    %16 = vector.shape_cast %15 : vector<4x8xf32> to vector<1x4x8xf32>
    "tpu.trace_start"() <{level = 10 : i32, message = "tws,tsc->twc"}> : () -> ()
    %cst_7 = arith.constant dense<0.000000e+00> : vector<1x4x32xf32>
    %17 = tpu.matmul %16, %1, %cst_7 {dimension_numbers = #tpu.dot_dimension_numbers<[2], [1], [1], [2], [0, 0, 0, 1, 1, 2], [0], [0]>} : vector<1x4x8xf32>, vector<1x8x32xf32>, vector<1x4x32xf32> -> vector<1x4x32xf32>
    "tpu.trace_stop"() : () -> ()
    %cst_8 = arith.constant 5.000000e-01 : f32
    %18 = vector.broadcast %cst_8 : f32 to vector<1x4x32xf32>
    %19 = arith.mulf %17, %18 : vector<1x4x32xf32>
    "tpu.trace_start"() <{level = 10 : i32, message = "twc,tqc->twq"}> : () -> ()
    %cst_9 = arith.constant dense<0.000000e+00> : vector<1x4x12xf32>
    %20 = tpu.matmul %19, %0, %cst_9 {dimension_numbers = #tpu.dot_dimension_numbers<[2], [2], [1], [1], [0, 0, 0, 1, 1, 1], [0], [0]>} : vector<1x4x32xf32>, vector<1x12x32xf32>, vector<1x4x12xf32> -> vector<1x4x12xf32>
    "tpu.trace_stop"() : () -> ()
    %21 = arith.mulf %0, %0 : vector<1x12x32xf32>
    %cst_10 = arith.constant dense<0.000000e+00> : vector<1x12xf32>
    %22 = vector.multi_reduction <add>, %21, %cst_10 [2] : vector<1x12x32xf32> to vector<1x12xf32>
    %23 = arith.mulf %19, %19 : vector<1x4x32xf32>
    %cst_11 = arith.constant dense<0.000000e+00> : vector<1x4xf32>
    %24 = vector.multi_reduction <add>, %23, %cst_11 [2] : vector<1x4x32xf32> to vector<1x4xf32>
    %cst_12 = arith.constant 2.000000e+00 : f32
    %25 = vector.broadcast %cst_12 : f32 to vector<1x4x12xf32>
    %26 = arith.mulf %25, %20 : vector<1x4x12xf32>
    %27 = vector.shape_cast %22 : vector<1x12xf32> to vector<1x1x12xf32>
    %28 = vector.broadcast %27 : vector<1x1x12xf32> to vector<1x4x12xf32>
    %29 = arith.subf %26, %28 : vector<1x4x12xf32>
    %30 = vector.shape_cast %24 : vector<1x4xf32> to vector<1x4x1xf32>
    %31 = vector.broadcast %30 : vector<1x4x1xf32> to vector<1x4x12xf32>
    %32 = arith.subf %29, %31 : vector<1x4x12xf32>
    %cst_13 = arith.constant 0.000000e+00 : f32
    %33 = vector.broadcast %cst_13 : f32 to vector<1x4x12xf32>
    %34 = arith.minimumf %32, %33 : vector<1x4x12xf32>
    %c0_14 = arith.constant 0 : index
    %c0_15 = arith.constant 0 : index
    %c0_16 = arith.constant 0 : index
    %35 = vector.load %arg3[%c0_14, %c0_15, %c0_16] : memref<1x4x12xf32, #tpu.memory_space<vmem>>, vector<1x4x12xf32>
    tpu.vector_store %arg3[%c0_14, %c0_15, %c0_16], %34 {strides = array<i32>} : memref<1x4x12xf32, #tpu.memory_space<vmem>>, vector<1x4x12xf32>,
    return
  }
  func.func @transform_0(%arg0: i32) -> (i32, i32, i32) {
    %c0_i32 = arith.constant 0 : i32
    %c0_i32_0 = arith.constant 0 : i32
    %c0_i32_1 = arith.constant 0 : i32
    return %arg0, %c0_i32, %c0_i32_0 : i32, i32, i32
  }
  func.func @transform_1(%arg0: i32) -> (i32, i32, i32) {
    %c0_i32 = arith.constant 0 : i32
    %c0_i32_0 = arith.constant 0 : i32
    %c0_i32_1 = arith.constant 0 : i32
    return %arg0, %c0_i32, %c0_i32_0 : i32, i32, i32
  }
  func.func @transform_2(%arg0: i32) -> (i32, i32, i32) {
    %c0_i32 = arith.constant 0 : i32
    %c0_i32_0 = arith.constant 0 : i32
    %c0_i32_1 = arith.constant 0 : i32
    return %arg0, %c0_i32, %c0_i32_0 : i32, i32, i32
  }
}

</mosaic_0001>

<llo_original>
// kernel: tpu_custom_call.1
$region0: #{tpu_custom_call.1}
  #allocation0 [shape = 'u32[]', space=smem, size = 0x4, offset = 0x4, fixed_abs, tag = 'smem constant byte address 0x4 - core index']
  #allocation1 [shape = 'u32[144,128]{1,0:T(1,128)}', space=vmem, size = 0x12000, scoped, tag = 'internal scratch']
  %s0 = inlined_call_operand.vmem [shape: f32[2,12,32], index: 0, kind: input, shape index: {}]
  %s1 = inlined_call_operand.vmem [shape: f32[2,8,32], index: 1, kind: input, shape index: {}]
  %s2 = inlined_call_operand.hbm [shape: f32[2,4,12], index: 2, kind: output, shape index: {}]
  %s3 = sld [smem:[#allocation0]]
  $region41: #{tpu_custom_call.1} parent=0
    _
  %s5 = ssub.s32 1, %s3
  %s6 = scalar_select 0, %s5, %s3
  $region1: #{tpu_custom_call.1} parent=0
    #allocation2 [shape = 'u8[4096]{0}', space=vmem, size = 0x1000, scoped, tag = 'output window, operand 0']
    #allocation3 [shape = 's32[2]{0}', space=sflag, size = 0x8, scoped, tag = 'scoped memory for tpu_custom_call.1']
    %7 = vsyncpa [#allocation3], 0
    %s8 = scalar_lea.sflag [#allocation3], 1
    %9 = vsyncpa %s8, 0
    loop: start=0, step=1, limit=4
    $region2: #{tpu_custom_call.1} parent=1 // loop_pre_header
      _
    $region3: #{tpu_custom_call.1} parent=1 // loop_header
      %s11 = sphi 0, %s15
      %p12 = scmp.ge.s32.totalorder %s11, 4
      %s21 = sphi 0, %s23
      %s24 = sphi 0, %s21
      %s25 = sphi 0, %s24
      %s41 = sphi 0, %s25
      %s47 = sphi 0, %s49
      %s50 = sphi 0, %s47
      %s51 = sphi 0, %s50
      %s67 = sphi 0, %s51
      %s73 = sphi 0, %s75
      %s76 = sphi 0, %s73
      %s77 = sphi 0, %s76
      %s93 = sphi 0, %s77
    $region4: #{tpu_custom_call.1} parent=1 // loop_header_branch
      %14 = sbr.rel (%p12) target = $region8
    $region5: #{tpu_custom_call.1} parent=1 // loop_body
      %s16 = ssub.s32 %s11, 1
      %s17 = ssub.s32 %s11, 2
      %s18 = sadd.s32 %s11, 1
      %s19 = ssub.s32 %s11, %s18
      %p20 = scmp.eq.s32.totalorder %s19, 0
      %s22 = sadd.s32 %s21, 1
      %s23 = scalar_select %p20, %s21, %s22
      %p26 = pneg %p20
      %p27 = scmp.eq.s32.totalorder %s11, 1
      %p28 = por %p26, %p27
      %p29 = scmp.ne.s32.totalorder %s21, %s24
      %p30 = scmp.eq.s32.totalorder %s11, 0
      %p31 = por %p29, %p30
      %p32 = scmp.ne.s32.totalorder %s21, %s24
      %p33 = scmp.eq.s32.totalorder %s16, 1
      %p34 = por %p32, %p33
      %p35 = scmp.ne.s32.totalorder %s24, %s25
      %p36 = scmp.eq.s32.totalorder %s16, 0
      %p37 = por %p35, %p36
      %p38 = scmp.ne.s32.totalorder %s24, %s25
      %p39 = scmp.eq.s32.totalorder %s17, 1
      %p40 = por %p38, %p39
      %p42 = scmp.ne.s32.totalorder %s25, %s41
      %p43 = scmp.eq.s32.totalorder %s17, 0
      %p44 = por %p42, %p43
      %s45 = ssub.s32 %s11, %s18
      %p46 = scmp.eq.s32.totalorder %s45, 0
      %s48 = sadd.s32 %s47, 1
      %s49 = scalar_select %p46, %s47, %s48
      %p52 = pneg %p46
      %p53 = scmp.eq.s32.totalorder %s11, 1
      %p54 = por %p52, %p53
      %p55 = scmp.ne.s32.totalorder %s47, %s50
      %p56 = scmp.eq.s32.totalorder %s11, 0
      %p57 = por %p55, %p56
      %p58 = scmp.ne.s32.totalorder %s47, %s50
      %p59 = scmp.eq.s32.totalorder %s16, 1
      %p60 = por %p58, %p59
      %p61 = scmp.ne.s32.totalorder %s50, %s51
      %p62 = scmp.eq.s32.totalorder %s16, 0
      %p63 = por %p61, %p62
      %p64 = scmp.ne.s32.totalorder %s50, %s51
      %p65 = scmp.eq.s32.totalorder %s17, 1
      %p66 = por %p64, %p65
      %p68 = scmp.ne.s32.totalorder %s51, %s67
      %p69 = scmp.eq.s32.totalorder %s17, 0
      %p70 = por %p68, %p69
      %s71 = ssub.s32 %s11, %s18
      %p72 = scmp.eq.s32.totalorder %s71, 0
      %s74 = sadd.s32 %s73, 1
      %s75 = scalar_select %p72, %s73, %s74
      %p78 = pneg %p72
      %p79 = scmp.eq.s32.totalorder %s11, 1
      %p80 = por %p78, %p79
      %p81 = scmp.ne.s32.totalorder %s73, %s76
      %p82 = scmp.eq.s32.totalorder %s11, 0
      %p83 = por %p81, %p82
      %p84 = scmp.ne.s32.totalorder %s73, %s76
      %p85 = scmp.eq.s32.totalorder %s16, 1
      %p86 = por %p84, %p85
      %p87 = scmp.ne.s32.totalorder %s76, %s77
      %p88 = scmp.eq.s32.totalorder %s16, 0
      %p89 = por %p87, %p88
      %p90 = scmp.ne.s32.totalorder %s76, %s77
      %p91 = scmp.eq.s32.totalorder %s17, 1
      %p92 = por %p90, %p91
      %p94 = scmp.ne.s32.totalorder %s77, %s93
      %p95 = scmp.eq.s32.totalorder %s17, 0
      %p96 = por %p94, %p95
      %p97 = scmp.le.s32.totalorder 1, %s11
      %p98 = scmp.lt.s32.totalorder %s11, 3
      %p99 = pnand %p97, %p98
      %p100 = pneg %p99
      // Predicated region
      $region9: #{tpu_custom_call.1} parent=5 // pred_check
        _
      $region10: #{tpu_custom_call.1} parent=5 // pred_check_branch
        %102 = sbr.rel (%p99) target = $region12
      $region11: #{tpu_custom_call.1} parent=5 // pred_region
        %s103 = ssub.s32 %s11, 1
      $region12: #{tpu_custom_call.1} parent=5 // pred_fallthru
        _
      %p104 = scmp.lt.s32.totalorder %s11, 2
      // Predicated region
      $region13: #{tpu_custom_call.1} parent=5 // pred_check
        %p105 = pneg %p104
      $region14: #{tpu_custom_call.1} parent=5 // pred_check_branch
        %107 = sbr.rel (%p105) target = $region16
      $region15: #{tpu_custom_call.1} parent=5 // pred_region
        // Predicated region
        $region17: #{tpu_custom_call.1} parent=15 // pred_check
          %p108 = pneg %p31
        $region18: #{tpu_custom_call.1} parent=15 // pred_check_branch
          %110 = sbr.rel (%p108) target = $region20
        $region19: #{tpu_custom_call.1} parent=15 // pred_region
          %p111 = scmp.lt.s32.totalorder %s11, 1
          %s112 = scalar_select %p111, %s11, 1
          %s113 = smul.addr %s112, 2
          %s114 = smul.addr %s113, 8
          %s115 = scalar_lea.vmem %s0, %s114
        $region20: #{tpu_custom_call.1} parent=15 // pred_fallthru
          _
        // Predicated region
        $region21: #{tpu_custom_call.1} parent=15 // pred_check
          %p116 = pneg %p57
        $region22: #{tpu_custom_call.1} parent=15 // pred_check_branch
          %118 = sbr.rel (%p116) target = $region24
        $region23: #{tpu_custom_call.1} parent=15 // pred_region
          %p119 = scmp.lt.s32.totalorder %s11, 1
          %s120 = scalar_select %p119, %s11, 1
          %s121 = smul.addr %s120, 8
          %s122 = scalar_lea.vmem %s1, %s121
        $region24: #{tpu_custom_call.1} parent=15 // pred_fallthru
          _
      $region16: #{tpu_custom_call.1} parent=5 // pred_fallthru
        _
      %p123 = scmp.le.s32.totalorder 1, %s11
      %p124 = scmp.lt.s32.totalorder %s11, 3
      %p125 = pnand %p123, %p124
      %p126 = pneg %p125
      // Predicated region
      $region25: #{tpu_custom_call.1} parent=5 // pred_check
        _
      $region26: #{tpu_custom_call.1} parent=5 // pred_check_branch
        %128 = sbr.rel (%p125) target = $region28
      $region27: #{tpu_custom_call.1} parent=5 // pred_region
        %s129 = ssub.s32 %s11, 1
        %p130 = scmp.lt.s32.totalorder %s16, 1
        %s131 = scalar_select %p130, %s16, 1
        %s132 = smul.addr %s131, 2
        %s133 = smul.addr %s132, 8
        %s134 = scalar_lea.vmem %s0, %s133
        %p135 = pneg %p37
        %p136 = pneg %p34
        %p137 = scmp.lt.s32.totalorder %s16, 1
        %s138 = scalar_select %p137, %s16, 1
        %s139 = smul.addr %s138, 8
        %s140 = scalar_lea.vmem %s1, %s139
        %p141 = pneg %p63
        %p142 = pneg %p60
        %p143 = pneg %p89
        %p144 = pneg %p86
        %s145 = sand.u32 %s76, 1
        %s146 = scalar_lea.sflag [#allocation3], %s145
        %s147 = sand.u32 %s76, 1
        %s148 = smul.addr %s147, 4
        %s149 = scalar_lea.vmem [#allocation2], %s148
        %p150 = scmp.lt.s32.totalorder %s16, 1
        %s151 = scalar_select %p150, %s16, 1
        %s152 = smul.addr %s151, 2
        %s153 = smul.addr %s152, 8
        %s154 = scalar_lea.vmem %s0, %s153
        %p155 = scmp.lt.s32.totalorder %s16, 1
        %s156 = scalar_select %p155, %s16, 1
        %s157 = smul.addr %s156, 8
        %s158 = scalar_lea.vmem %s1, %s157
        %v159 = vld [vmem:[%s154] sm:$0xff]
        %v160 = vld [vmem:[%s154 + $0x8] sm:$0xf]
        %v161 = vld [vmem:[%s158] sm:$0xff]
        %v162 = vlaneseq
        %v163 = vshrl.u32 %v162, 7
        %v164 = vlaneseq
        %v165 = vand.u32 %v164, 127
        %v166 = vmul.u32 %v163, 2
        %vm167 = vcmp.ge.s32.totalorder %v165, %v166
        %v168 = vadd.s32 %v163, 1
        %v169 = vmul.u32 %v168, 2
        %vm170 = vcmp.lt.s32.totalorder %v165, %v169
        %vm171 = vmand %vm167, %vm170
        %v172 = vsel %vm171, 1.0, 0.0
        %vm173 = vcmask 64512
        %v175 = vsel %vm173, %v172, 0
        %177 = vmatprep.subr.mxu0 0.0
        %178 = vmatpush1.msra.mxu0 0.0
        %179 = vmatprep.subr.mxu0 0.0
        %180 = vmatpush1.msra.mxu0 0.0
        %181 = vmatprep.subr.mxu0 0.0
        %182 = vmatpush1.msra.mxu0 0.0
        %183 = vmatprep.subr.mxu0 0.0
        %184 = vmatpush1.msra.mxu0 0.0
        %185 = vmatprep.subr.mxu0 0.0
        %186 = vmatpush1.msra.mxu0 0.0
        %187 = vmatprep.subr.mxu0 0.0
        %188 = vmatpush1.msra.mxu0 0.0
        %189 = vmatprep.subr.mxu0 0.0
        %190 = vmatpush1.msra.mxu0 0.0
        %191 = vmatprep.subr.mxu0 0.0
        %192 = vmatpush1.msra.mxu0 0.0
        %193 = vmatprep.subr.mxu0 0.0
        %194 = vmatpush1.msra.mxu0 0.0
        %195 = vmatprep.subr.mxu0 0.0
        %196 = vmatpush1.msra.mxu0 0.0
        %197 = vmatprep.subr.mxu0 0.0
        %198 = vmatpush1.msra.mxu0 0.0
        %199 = vmatprep.subr.mxu0 0.0
        %200 = vmatpush1.msra.mxu0 0.0
        %201 = vmatprep.subr.mxu0 0.0
        %202 = vmatpush1.msra.mxu0 0.0
        %203 = vmatprep.subr.mxu0 0.0
        %204 = vmatpush1.msra.mxu0 0.0
        %205 = vmatprep.subr.mxu0 0.0
        %206 = vmatpush1.msra.mxu0 0.0
        %207 = vmatprep.subr.mxu0 0.0
        %208 = vmatpush1.msra.mxu0 %v161
        %209 = vmatprep.subr.mxu0 0.0
        %210 = vmatpush2.msra.mxu0 0.0
        %211 = vmatprep.subr.mxu0 0.0
        %212 = vmatpush2.msra.mxu0 0.0
        %213 = vmatprep.subr.mxu0 0.0
        %214 = vmatpush2.msra.mxu0 0.0
        %215 = vmatprep.subr.mxu0 0.0
        %216 = vmatpush2.msra.mxu0 0.0
        %217 = vmatprep.subr.mxu0 0.0
        %218 = vmatpush2.msra.mxu0 0.0
        %219 = vmatprep.subr.mxu0 0.0
        %220 = vmatpush2.msra.mxu0 0.0
        %221 = vmatprep.subr.mxu0 0.0
        %222 = vmatpush2.msra.mxu0 0.0
        %223 = vmatprep.subr.mxu0 0.0
        %224 = vmatpush2.msra.mxu0 0.0
        %225 = vmatprep.subr.mxu0 0.0
        %226 = vmatpush2.msra.mxu0 0.0
        %227 = vmatprep.subr.mxu0 0.0
        %228 = vmatpush2.msra.mxu0 0.0
        %229 = vmatprep.subr.mxu0 0.0
        %230 = vmatpush2.msra.mxu0 0.0
        %231 = vmatprep.subr.mxu0 0.0
        %232 = vmatpush2.msra.mxu0 0.0
        %233 = vmatprep.subr.mxu0 0.0
        %234 = vmatpush2.msra.mxu0 0.0
        %235 = vmatprep.subr.mxu0 0.0
        %236 = vmatpush2.msra.mxu0 0.0
        %237 = vmatprep.subr.mxu0 0.0
        %238 = vmatpush2.msra.mxu0 0.0
        %239 = vmatprep.subr.mxu0 0.0
        %240 = vmatpush2.msra.mxu0 0.0
        %241 = vmatprep.mubr.f32.mxu0 0.0
        %242 = vmatmul.mubr.f32.gmra.mxu0 %v175
        %v243 = vpop.f32.mrf.mxu0
        %v244 = vadd.f32 0.0, %v243
        %v245 = vpop.f32.mrf.mxu0
        %246 = vdwg.mxu0
        %v247 = vmul.f32 %v244, 0.5
        %vm248 = vcmask 261120
        %v250 = vsel %vm248, %v247, 0
        %v253 = vsel %vm248, %v159, 0
        %v256 = vsel %vm248, %v160, 0
        %258 = vmatprep.subr.mxu0 0.0
        %259 = vmatpush1.xpose.msra.mxu0 0.0
        %260 = vmatprep.subr.mxu0 0.0
        %261 = vmatpush1.xpose.msra.mxu0 0.0
        %262 = vmatprep.subr.mxu0 0.0
        %263 = vmatpush1.xpose.msra.mxu0 0.0
        %264 = vmatprep.subr.mxu0 0.0
        %265 = vmatpush1.xpose.msra.mxu0 0.0
        %266 = vmatprep.subr.mxu0 0.0
        %267 = vmatpush1.xpose.msra.mxu0 0.0
        %268 = vmatprep.subr.mxu0 0.0
        %269 = vmatpush1.xpose.msra.mxu0 0.0
        %270 = vmatprep.subr.mxu0 0.0
        %271 = vmatpush1.xpose.msra.mxu0 0.0
        %272 = vmatprep.subr.mxu0 0.0
        %273 = vmatpush1.xpose.msra.mxu0 0.0
        %274 = vmatprep.subr.mxu0 0.0
        %275 = vmatpush1.xpose.msra.mxu0 0.0
        %276 = vmatprep.subr.mxu0 0.0
        %277 = vmatpush1.xpose.msra.mxu0 0.0
        %278 = vmatprep.subr.mxu0 0.0
        %279 = vmatpush1.xpose.msra.mxu0 0.0
        %280 = vmatprep.subr.mxu0 0.0
        %281 = vmatpush1.xpose.msra.mxu0 0.0
        %282 = vmatprep.subr.mxu0 0.0
        %283 = vmatpush1.xpose.msra.mxu0 0.0
        %284 = vmatprep.subr.mxu0 0.0
        %285 = vmatpush1.xpose.msra.mxu0 0.0
        %286 = vmatprep.subr.mxu0 0.0
        %287 = vmatpush1.xpose.msra.mxu0 %v256
        %288 = vmatprep.subr.mxu0 0.0
        %289 = vmatpush1.xpose.msra.mxu0 %v253
        %290 = vmatprep.subr.mxu0 0.0
        %291 = vmatpush2.xpose.msra.mxu0 0.0
        %292 = vmatprep.subr.mxu0 0.0
        %293 = vmatpush2.xpose.msra.mxu0 0.0
        %294 = vmatprep.subr.mxu0 0.0
        %295 = vmatpush2.xpose.msra.mxu0 0.0
        %296 = vmatprep.subr.mxu0 0.0
        %297 = vmatpush2.xpose.msra.mxu0 0.0
        %298 = vmatprep.subr.mxu0 0.0
        %299 = vmatpush2.xpose.msra.mxu0 0.0
        %300 = vmatprep.subr.mxu0 0.0
        %301 = vmatpush2.xpose.msra.mxu0 0.0
        %302 = vmatprep.subr.mxu0 0.0
        %303 = vmatpush2.xpose.msra.mxu0 0.0
        %304 = vmatprep.subr.mxu0 0.0
        %305 = vmatpush2.xpose.msra.mxu0 0.0
        %306 = vmatprep.subr.mxu0 0.0
        %307 = vmatpush2.xpose.msra.mxu0 0.0
        %308 = vmatprep.subr.mxu0 0.0
        %309 = vmatpush2.xpose.msra.mxu0 0.0
        %310 = vmatprep.subr.mxu0 0.0
        %311 = vmatpush2.xpose.msra.mxu0 0.0
        %312 = vmatprep.subr.mxu0 0.0
        %313 = vmatpush2.xpose.msra.mxu0 0.0
        %314 = vmatprep.subr.mxu0 0.0
        %315 = vmatpush2.xpose.msra.mxu0 0.0
        %316 = vmatprep.subr.mxu0 0.0
        %317 = vmatpush2.xpose.msra.mxu0 0.0
        %318 = vmatprep.subr.mxu0 0.0
        %319 = vmatpush2.xpose.msra.mxu0 0.0
        %320 = vmatprep.subr.mxu0 0.0
        %321 = vmatpush2.xpose.msra.mxu0 0.0
        %322 = vmatprep.mubr.f32.mxu0 0.0
        %323 = vmatmul.mubr.f32.gmra.mxu0 %v250
        %v324 = vpop.f32.mrf.mxu0
        %v325 = vadd.f32 0.0, %v324
        %v326 = vpop.f32.mrf.mxu0
        %327 = vdwg.mxu0
        %v328 = vmul.f32 %v159, %v159
        %v329 = vmul.f32 %v160, %v160
        %v330 = vsel %vm248, %v328, 0.0
        %331 = vadd.xlane.f32.xlu0 %v330
        %v332 = vpop.xlane.xlu0 %331
        %vm333 = vcmask 257024
        %v334 = vsel %vm333, %v329, 0.0
        %335 = vadd.xlane.f32.xlu0 %v334
        %v336 = vpop.xlane.xlu0 %335
        %v337 = vmul.f32 %v247, %v247
        %v338 = vsel %vm333, %v337, 0.0
        %339 = vadd.xlane.f32.xlu0 %v338
        %v340 = vpop.xlane.xlu0 %339
        %v341 = vmul.f32 %v325, 2.0
        %v344 = vlaneseq
        %v345 = vshrl.u32 %v344, 7
        %v346 = vsub.s32 %v165, %v345
        %v347 = vrot.slane %v332, %v346
        %v348 = vadd.s32 %v165, 4294967288
        %v349 = vlaneseq
        %v350 = vshrl.u32 %v349, 7
        %v351 = vsub.s32 %v348, %v350
        %v352 = vrot.slane %v336, %v351
        %vm353 = vcmask 130112
        %v354 = vsel %vm353, %v352, %v347
        %vm355 = vcmask 1042434
        %v356 = vsel %vm355, %v354, %v354
        %vm357 = vcmask 1043459
        %v358 = vsel %vm357, %v354, %v356
        %v360 = vsub.f32 %v341, %v358
        %v361 = vsub.f32 %v360, %v340
        %v362 = vmin.f32 %v361, 0.0
        %vm363 = vcmask 93184
        %364 = vst.msk [vmem:[%s149] sm:$0xf] %vm363, %v362
        %s365 = sand.u32 %s76, 1
        %s366 = scalar_lea.sflag [#allocation3], %s365
        %s367 = sand.u32 %s76, 1
        %s368 = smul.addr %s367, 4
        %s369 = scalar_lea.vmem [#allocation2], %s368
        // Predicated region
        $region29: #{tpu_custom_call.1} parent=27 // pred_check
          %p370 = pneg %p86
        $region30: #{tpu_custom_call.1} parent=27 // pred_check_branch
          %372 = sbr.rel (%p370) target = $region32
        $region31: #{tpu_custom_call.1} parent=27 // pred_region
          %s374 = ssub.s32 64, 64
          %375 = vsyncadd %s366, %s374
          %s376 = smul.addr %s16, 64
          %s377 = scalar_lea.hbm %s2, %s376
          %s379 = sshll.u32 %s369, 4
          %s380 = int_to_ptr.vmem [resolvable:$true] %s379
          %382 = dma.vmem_to_hbm [thread:$0]  %s380, 64, %s377, %s366
        $region32: #{tpu_custom_call.1} parent=27 // pred_fallthru
          _
      $region28: #{tpu_custom_call.1} parent=5 // pred_fallthru
        _
      %p383 = scmp.le.s32.totalorder 2, %s11
      // Predicated region
      $region33: #{tpu_custom_call.1} parent=5 // pred_check
        %p384 = pneg %p383
      $region34: #{tpu_custom_call.1} parent=5 // pred_check_branch
        %386 = sbr.rel (%p384) target = $region36
      $region35: #{tpu_custom_call.1} parent=5 // pred_region
        %s387 = ssub.s32 %s11, 2
        // Predicated region
        $region37: #{tpu_custom_call.1} parent=35 // pred_check
          %p388 = pneg %p92
        $region38: #{tpu_custom_call.1} parent=35 // pred_check_branch
          %390 = sbr.rel (%p388) target = $region40
        $region39: #{tpu_custom_call.1} parent=35 // pred_region
          %s391 = sand.u32 %s77, 1
          %s392 = scalar_lea.sflag [#allocation3], %s391
          %s393 = sand.u32 %s77, 1
          %s394 = smul.addr %s393, 4
          %s395 = scalar_lea.vmem [#allocation2], %s394
          %396 = dma.done %s392, 64
        $region40: #{tpu_custom_call.1} parent=35 // pred_fallthru
          _
      $region36: #{tpu_custom_call.1} parent=5 // pred_fallthru
        _
    $region6: #{tpu_custom_call.1} parent=1 // loop_footer
      %s15 = sadd.s32 1, %s11
    $region7: #{tpu_custom_call.1} parent=1 // loop_footer_branch
      %10 = sbr.rel target = $region3
    $region8: #{tpu_custom_call.1} parent=1 // loop_exit
      _
    %397 = vsyncpa [#allocation3], 1
    %s398 = scalar_lea.sflag [#allocation3], 1
    %399 = vsyncpa %s398, 1

</llo_original>
